<compile_context>
chip_gen: v5e
topology: v5e:2x2
jax: 0.10.0
libtpu: 0.0.40
codegen_flags: <defaults>
</compile_context>

<pallas_src>
import functools

import jax
import jax.numpy as jnp
from jax.experimental import pallas as pl
from jax.experimental.pallas import tpu as pltpu


def _round_up(x: int, m: int) -> int:
    return ((x + m - 1) // m) * m


def _fused_mlp_kernel(x_ref, w_ref, b_ref, o_ref, *, num_layers: int):
    """One batch-tile of the whole MLP.

    x_ref: (tm, Dpad)        VMEM  (current batch tile, lane-dense)
    w_ref: (L, Dpad, Dpad)   VMEM  (all layer weights, resident)
    b_ref: (L, 1, Dpad)      VMEM  (all layer biases)
    o_ref: (tm, Dpad)        VMEM
    """
    h = x_ref[...].astype(jnp.float32)
    for l in range(num_layers):  # static unrolled loop; activation stays on-chip
        acc = jnp.dot(h, w_ref[l], preferred_element_type=jnp.float32)
        acc = acc + b_ref[l]                 # (1, Dpad) broadcast over rows
        if l < num_layers - 1:
            acc = jnp.maximum(acc, 0.0)      # ReLU between hidden layers only
        h = acc
    o_ref[...] = h.astype(o_ref.dtype)


def fused_mlp_pallas(x2d, w_stack, b_stack, *, tm_max=256):
    """x2d: (M, Dpad) padded input, w_stack: (L, Dpad, Dpad), b_stack: (L, 1, Dpad)."""
    M, dpad = x2d.shape
    L = w_stack.shape[0]

    # Batch tiling: sublane-aligned, capped at tm_max; pad M so it divides evenly.
    tm = min(tm_max, _round_up(M, 8))
    m_pad = _round_up(M, tm)
    if m_pad != M:
        x2d = jnp.pad(x2d, ((0, m_pad - M), (0, 0)))
    grid = (m_pad // tm,)

    kernel = functools.partial(_fused_mlp_kernel, num_layers=L)
    out = pl.pallas_call(
        kernel,
        out_shape=jax.ShapeDtypeStruct((m_pad, dpad), x2d.dtype),
        grid=grid,
        in_specs=[
            pl.BlockSpec((tm, dpad), lambda i: (i, 0)),
            # Constant index_maps: weights / biases DMA'd once, stay resident.
            pl.BlockSpec((L, dpad, dpad), lambda i: (0, 0, 0)),
            pl.BlockSpec((L, 1, dpad), lambda i: (0, 0, 0)),
        ],
        out_specs=pl.BlockSpec((tm, dpad), lambda i: (i, 0)),
        compiler_params=pltpu.CompilerParams(
            # Batch tiles are independent -> megacore-shardable on v7x.
            dimension_semantics=("parallel",),
            vmem_limit_bytes=32 * 1024 * 1024,
        ),
    )(x2d, w_stack, b_stack)
    return out[:M]


class MLPPallas:
    """Very simple multi-layer perceptron (FFN), fused Pallas TPU implementation."""

    def __init__(self, input_dim, hidden_dim, output_dim, num_layers, key):
        self.num_layers = num_layers
        self.input_dim = input_dim
        self.output_dim = output_dim
        h = [hidden_dim] * (num_layers - 1)
        dims = list(zip([input_dim] + h, h + [output_dim]))

        self.params = []  # un-padded (w, b) per layer (for reference checks)
        for (n, k) in dims:
            key, kw, kb = jax.random.split(key, 3)
            # PyTorch nn.Linear default init: U(-1/sqrt(fan_in), 1/sqrt(fan_in))
            bound = 1.0 / float(n) ** 0.5
            # Weight stored as (in_features, out_features) so the kernel does x @ W.
            w = jax.random.uniform(kw, (n, k), jnp.float32, -bound, bound)
            b = jax.random.uniform(kb, (k,), jnp.float32, -bound, bound)
            self.params.append((w, b))

        # Pad every feature dim to a common lane-dense width (multiple of 128)
        # and stack, so the kernel sees one (L, Dpad, Dpad) weight tensor.
        # Zero-padded rows/cols + zero bias keep padded lanes exactly zero
        # through every layer (ReLU(0) == 0), so results are unchanged.
        all_dims = [input_dim] + h + [output_dim]
        self.dpad = _round_up(max(all_dims), 128)
        # TODO(synk): if L * Dpad^2 * 4 bytes ever exceeds the VMEM budget
        # (very large hidden dims), switch to per-layer K/N tiling with an f32
        # scratch accumulator instead of keeping the full weight stack resident.
        w_pad, b_pad = [], []
        for (w, b) in self.params:
            n, k = w.shape
            w_pad.append(jnp.pad(w, ((0, self.dpad - n), (0, self.dpad - k))))
            b_pad.append(jnp.pad(b, (0, self.dpad - k)).reshape(1, self.dpad))
        self.w_stack = jnp.stack(w_pad)  # (L, Dpad, Dpad)
        self.b_stack = jnp.stack(b_pad)  # (L, 1, Dpad)

    def __call__(self, x):
        # x: (..., input_dim) — flatten leading dims into a 2-D batch.
        lead_shape = x.shape[:-1]
        x2d = x.reshape(-1, x.shape[-1])
        x2d = jnp.pad(x2d, ((0, 0), (0, self.dpad - x2d.shape[-1])))
        out = fused_mlp_pallas(x2d, self.w_stack, self.b_stack)
        out = out[:, : self.output_dim]
        return out.reshape(*lead_shape, self.output_dim)


def _reference_mlp(params, num_layers, x):
    """Pure-JAX reference for correctness checking."""
    lead_shape = x.shape[:-1]
    x2d = x.reshape(-1, x.shape[-1])
    for i, (w, b) in enumerate(params):
        x2d = x2d @ w + b
        if i < num_layers - 1:
            x2d = jnp.maximum(x2d, 0.0)
    return x2d.reshape(*lead_shape, x2d.shape[-1])


if __name__ == "__main__":
    key = jax.random.PRNGKey(0)
    key, k_in = jax.random.split(key)

    # Small shapes consistent with the module's forward:
    # (batch, seq, input_dim) -> (batch, seq, output_dim)
    batch, seq = 2, 8
    input_dim, hidden_dim, output_dim, num_layers = 32, 64, 16, 3

    mlp = MLPPallas(input_dim, hidden_dim, output_dim, num_layers, key)
    x = jax.random.normal(k_in, (batch, seq, input_dim), jnp.float32)

    out = jax.block_until_ready(mlp(x))

    ref = _reference_mlp(mlp.params, num_layers, x)
    assert out.shape == (batch, seq, output_dim), out.shape
    assert jnp.allclose(out, ref, atol=1e-5, rtol=1e-5), "mismatch vs reference"

    print("KERNEL_OK")
</pallas_src>

<mosaic_0001>
module attributes {stable_mosaic.version = 11 : i64} {
  func.func @_fused_mlp_kernel(%arg0: i32, %arg1: memref<16x128xf32, #tpu.memory_space<vmem>>, %arg2: memref<3x128x128xf32, #tpu.memory_space<vmem>>, %arg3: memref<3x1x128xf32, #tpu.memory_space<vmem>>, %arg4: memref<16x128xf32, #tpu.memory_space<vmem>>) attributes {dimension_semantics = [#tpu.dimension_semantics<parallel>], iteration_bounds = array<i64: 1>, scalar_prefetch = 0 : i64, scratch_operands = 0 : i64, tpu.core_type = #tpu.core_type<tc>, window_params = [{transform_indices = @transform_0, window_bounds = array<i64: 16, 128>}, {pipeline_mode = #tpu.pipeline_mode<synchronous>, transform_indices = @transform_1, window_bounds = array<i64: 3, 128, 128>}, {pipeline_mode = #tpu.pipeline_mode<synchronous>, transform_indices = @transform_2, window_bounds = array<i64: 3, 1, 128>}, {transform_indices = @transform_3, window_bounds = array<i64: 16, 128>}]} {
    %c0 = arith.constant 0 : index
    %c0_0 = arith.constant 0 : index
    %0 = vector.load %arg1[%c0, %c0_0] : memref<16x128xf32, #tpu.memory_space<vmem>>, vector<16x128xf32>
    %c0_1 = arith.constant 0 : index
    %c0_2 = arith.constant 0 : index
    %c0_3 = arith.constant 0 : index
    %1 = vector.load %arg2[%c0_1, %c0_2, %c0_3] : memref<3x128x128xf32, #tpu.memory_space<vmem>>, vector<1x128x128xf32>
    %2 = vector.shape_cast %1 : vector<1x128x128xf32> to vector<128x128xf32>
    %cst = arith.constant dense<0.000000e+00> : vector<16x128xf32>
    %3 = tpu.matmul %0, %2, %cst {dimension_numbers = #tpu.dot_dimension_numbers<[1], [0], [0], [1], [0, 0, 1, 1], [], []>} : vector<16x128xf32>, vector<128x128xf32>, vector<16x128xf32> -> vector<16x128xf32>
    %c0_4 = arith.constant 0 : index
    %c0_5 = arith.constant 0 : index
    %c0_6 = arith.constant 0 : index
    %4 = vector.load %arg3[%c0_4, %c0_5, %c0_6] : memref<3x1x128xf32, #tpu.memory_space<vmem>>, vector<1x1x128xf32>
    %5 = vector.shape_cast %4 : vector<1x1x128xf32> to vector<1x128xf32>
    %6 = vector.broadcast %5 : vector<1x128xf32> to vector<16x128xf32>
    %7 = arith.addf %3, %6 : vector<16x128xf32>
    %cst_7 = arith.constant 0.000000e+00 : f32
    %8 = vector.broadcast %cst_7 : f32 to vector<16x128xf32>
    %9 = arith.maximumf %7, %8 : vector<16x128xf32>
    %c1 = arith.constant 1 : index
    %c0_8 = arith.constant 0 : index
    %c0_9 = arith.constant 0 : index
    %10 = vector.load %arg2[%c1, %c0_8, %c0_9] : memref<3x128x128xf32, #tpu.memory_space<vmem>>, vector<1x128x128xf32>
    %11 = vector.shape_cast %10 : vector<1x128x128xf32> to vector<128x128xf32>
    %cst_10 = arith.constant dense<0.000000e+00> : vector<16x128xf32>
    %12 = tpu.matmul %9, %11, %cst_10 {dimension_numbers = #tpu.dot_dimension_numbers<[1], [0], [0], [1], [0, 0, 1, 1], [], []>} : vector<16x128xf32>, vector<128x128xf32>, vector<16x128xf32> -> vector<16x128xf32>
    %c1_11 = arith.constant 1 : index
    %c0_12 = arith.constant 0 : index
    %c0_13 = arith.constant 0 : index
    %13 = vector.load %arg3[%c1_11, %c0_12, %c0_13] : memref<3x1x128xf32, #tpu.memory_space<vmem>>, vector<1x1x128xf32>
    %14 = vector.shape_cast %13 : vector<1x1x128xf32> to vector<1x128xf32>
    %15 = vector.broadcast %14 : vector<1x128xf32> to vector<16x128xf32>
    %16 = arith.addf %12, %15 : vector<16x128xf32>
    %cst_14 = arith.constant 0.000000e+00 : f32
    %17 = vector.broadcast %cst_14 : f32 to vector<16x128xf32>
    %18 = arith.maximumf %16, %17 : vector<16x128xf32>
    %c2 = arith.constant 2 : index
    %c0_15 = arith.constant 0 : index
    %c0_16 = arith.constant 0 : index
    %19 = vector.load %arg2[%c2, %c0_15, %c0_16] : memref<3x128x128xf32, #tpu.memory_space<vmem>>, vector<1x128x128xf32>
    %20 = vector.shape_cast %19 : vector<1x128x128xf32> to vector<128x128xf32>
    %cst_17 = arith.constant dense<0.000000e+00> : vector<16x128xf32>
    %21 = tpu.matmul %18, %20, %cst_17 {dimension_numbers = #tpu.dot_dimension_numbers<[1], [0], [0], [1], [0, 0, 1, 1], [], []>} : vector<16x128xf32>, vector<128x128xf32>, vector<16x128xf32> -> vector<16x128xf32>
    %c2_18 = arith.constant 2 : index
    %c0_19 = arith.constant 0 : index
    %c0_20 = arith.constant 0 : index
    %22 = vector.load %arg3[%c2_18, %c0_19, %c0_20] : memref<3x1x128xf32, #tpu.memory_space<vmem>>, vector<1x1x128xf32>
    %23 = vector.shape_cast %22 : vector<1x1x128xf32> to vector<1x128xf32>
    %24 = vector.broadcast %23 : vector<1x128xf32> to vector<16x128xf32>
    %25 = arith.addf %21, %24 : vector<16x128xf32>
    %c0_21 = arith.constant 0 : index
    %c0_22 = arith.constant 0 : index
    %26 = vector.load %arg4[%c0_21, %c0_22] : memref<16x128xf32, #tpu.memory_space<vmem>>, vector<16x128xf32>
    tpu.vector_store %arg4[%c0_21, %c0_22], %25 {strides = array<i32>} : memref<16x128xf32, #tpu.memory_space<vmem>>, vector<16x128xf32>,
    return
  }
  func.func @transform_0(%arg0: i32) -> (i32, i32) {
    %c0_i32 = arith.constant 0 : i32
    %c0_i32_0 = arith.constant 0 : i32
    return %arg0, %c0_i32 : i32, i32
  }
  func.func @transform_1(%arg0: i32) -> (i32, i32, i32) {
    %c0_i32 = arith.constant 0 : i32
    %c0_i32_0 = arith.constant 0 : i32
    %c0_i32_1 = arith.constant 0 : i32
    %c0_i32_2 = arith.constant 0 : i32
    return %c0_i32, %c0_i32_0, %c0_i32_1 : i32, i32, i32
  }
  func.func @transform_2(%arg0: i32) -> (i32, i32, i32) {
    %c0_i32 = arith.constant 0 : i32
    %c0_i32_0 = arith.constant 0 : i32
    %c0_i32_1 = arith.constant 0 : i32
    %c0_i32_2 = arith.constant 0 : i32
    return %c0_i32, %c0_i32_0, %c0_i32_1 : i32, i32, i32
  }
  func.func @transform_3(%arg0: i32) -> (i32, i32) {
    %c0_i32 = arith.constant 0 : i32
    %c0_i32_0 = arith.constant 0 : i32
    return %arg0, %c0_i32 : i32, i32
  }
}

</mosaic_0001>

<llo_original>
// kernel: tpu_custom_call.1
$region0: #{tpu_custom_call.1}
  #allocation0 [shape = 'u32[]', space=smem, size = 0x4, offset = 0x4, fixed_abs, tag = 'smem constant byte address 0x4 - core index']
  #allocation1 [shape = 'u32[72,128]{1,0:T(1,128)}', space=vmem, size = 0x9000, scoped, tag = 'internal scratch']
  %s0 = inlined_call_operand.hbm [shape: f32[16,128], index: 0, kind: input, shape index: {}]
  %s1 = inlined_call_operand.hbm [shape: f32[3,128,128], index: 1, kind: input, shape index: {}]
  %s2 = inlined_call_operand.hbm [shape: f32[3,1,128], index: 2, kind: input, shape index: {}]
  %s3 = inlined_call_operand.hbm [shape: f32[16,128], index: 3, kind: output, shape index: {}]
  %s4 = sld [smem:[#allocation0]]
  $region34: #{tpu_custom_call.1} parent=0
    _
  %s6 = ssub.s32 1, %s4
  %s7 = scalar_select 0, %s6, %s4
  $region1: #{tpu_custom_call.1} parent=0
    #allocation2 [shape = 'u8[8192]{0}', space=vmem, size = 0x2000, scoped, tag = 'input window, operand 0, single buffered']
    #allocation3 [shape = 's32[1]{0}', space=sflag, size = 0x4, scoped, tag = 'scoped memory for tpu_custom_call.1']
    #allocation4 [shape = 's32[1]{0}', space=sflag, size = 0x4, scoped, tag = 'scoped memory for tpu_custom_call.1']
    #allocation5 [shape = 'u8[196608]{0}', space=vmem, size = 0x30000, scoped, tag = 'input window, operand 1, single buffered']
    #allocation6 [shape = 's32[1]{0}', space=sflag, size = 0x4, scoped, tag = 'scoped memory for tpu_custom_call.1']
    #allocation7 [shape = 'u8[1536]{0}', space=vmem, size = 0x800, scoped, tag = 'input window, operand 2, single buffered']
    #allocation8 [shape = 'u8[8192]{0}', space=vmem, size = 0x2000, scoped, tag = 'output window, operand 0, single buffered']
    %8 = vsyncpa [#allocation3], 0
    %9 = vsyncpa [#allocation6], 0
    %10 = vsyncpa [#allocation4], 0
    // Predicated region
    $region2: #{tpu_custom_call.1} parent=1 // pred_check
      _
    $region3: #{tpu_custom_call.1} parent=1 // pred_check_branch
      %12 = sbr.rel (0) target = $region5
    $region4: #{tpu_custom_call.1} parent=1 // pred_region
      %14 = vsyncadd [#allocation3], 0
      %s15 = sshll.u32 %s0, 4
      %s16 = int_to_ptr.hbm [resolvable:$true] %s15
      %s17 = sshll.u32 [#allocation2], 4
      %s18 = int_to_ptr.vmem [resolvable:$true] %s17
      %23 = dma.hbm_to_vmem [thread:$0]  %s16, 256, %s18, [#allocation3], 128, 128, 8
    $region5: #{tpu_custom_call.1} parent=1 // pred_fallthru
      _
    // Predicated region
    $region6: #{tpu_custom_call.1} parent=1 // pred_check
      _
    $region7: #{tpu_custom_call.1} parent=1 // pred_check_branch
      %25 = sbr.rel (0) target = $region9
    $region8: #{tpu_custom_call.1} parent=1 // pred_region
      %27 = vsyncadd [#allocation6], 0
      %s28 = sshll.u32 %s1, 4
      %s29 = int_to_ptr.hbm [resolvable:$true] %s28
      %s30 = sshll.u32 [#allocation5], 4
      %s31 = int_to_ptr.vmem [resolvable:$true] %s30
      %36 = dma.hbm_to_vmem [thread:$0]  %s29, 6144, %s31, [#allocation6], 128, 128, 8
    $region9: #{tpu_custom_call.1} parent=1 // pred_fallthru
      _
    // Predicated region
    $region10: #{tpu_custom_call.1} parent=1 // pred_check
      _
    $region11: #{tpu_custom_call.1} parent=1 // pred_check_branch
      %38 = sbr.rel (0) target = $region13
    $region12: #{tpu_custom_call.1} parent=1 // pred_region
      %40 = vsyncadd [#allocation6], 0
      %s41 = sshll.u32 %s2, 4
      %s42 = int_to_ptr.hbm [resolvable:$true] %s41
      %s43 = sshll.u32 [#allocation7], 4
      %s44 = int_to_ptr.vmem [resolvable:$true] %s43
      %49 = dma.hbm_to_vmem [thread:$0]  %s42, 48, %s44, [#allocation6], 16, 16, 1
    $region13: #{tpu_custom_call.1} parent=1 // pred_fallthru
      _
    // Predicated region
    $region14: #{tpu_custom_call.1} parent=1 // pred_check
      _
    $region15: #{tpu_custom_call.1} parent=1 // pred_check_branch
      %51 = sbr.rel (0) target = $region17
    $region16: #{tpu_custom_call.1} parent=1 // pred_region
      %53 = dma.done [#allocation3], 256
    $region17: #{tpu_custom_call.1} parent=1 // pred_fallthru
      _
    // Predicated region
    $region18: #{tpu_custom_call.1} parent=1 // pred_check
      _
    $region19: #{tpu_custom_call.1} parent=1 // pred_check_branch
      %55 = sbr.rel (0) target = $region21
    $region20: #{tpu_custom_call.1} parent=1 // pred_region
      %57 = dma.done [#allocation6], 6144
    $region21: #{tpu_custom_call.1} parent=1 // pred_fallthru
      _
    // Predicated region
    $region22: #{tpu_custom_call.1} parent=1 // pred_check
      _
    $region23: #{tpu_custom_call.1} parent=1 // pred_check_branch
      %59 = sbr.rel (0) target = $region25
    $region24: #{tpu_custom_call.1} parent=1 // pred_region
      %61 = dma.done [#allocation6], 48
    $region25: #{tpu_custom_call.1} parent=1 // pred_fallthru
      _
    %v62 = vld [vmem:[#allocation2] sm:$0xff]
    %v63 = vld [vmem:[#allocation2 + $0x8] sm:$0xff]
    %v64 = vld [vmem:[#allocation5] sm:$0xff]
    %v65 = vld [vmem:[#allocation5 + $0x8] sm:$0xff]
    %v66 = vld [vmem:[#allocation5 + $0x10] sm:$0xff]
    %v67 = vld [vmem:[#allocation5 + $0x18] sm:$0xff]
    %v68 = vld [vmem:[#allocation5 + $0x20] sm:$0xff]
    %v69 = vld [vmem:[#allocation5 + $0x28] sm:$0xff]
    %v70 = vld [vmem:[#allocation5 + $0x30] sm:$0xff]
    %v71 = vld [vmem:[#allocation5 + $0x38] sm:$0xff]
    %v72 = vld [vmem:[#allocation5 + $0x40] sm:$0xff]
    %v73 = vld [vmem:[#allocation5 + $0x48] sm:$0xff]
    %v74 = vld [vmem:[#allocation5 + $0x50] sm:$0xff]
    %v75 = vld [vmem:[#allocation5 + $0x58] sm:$0xff]
    %v76 = vld [vmem:[#allocation5 + $0x60] sm:$0xff]
    %v77 = vld [vmem:[#allocation5 + $0x68] sm:$0xff]
    %v78 = vld [vmem:[#allocation5 + $0x70] sm:$0xff]
    %v79 = vld [vmem:[#allocation5 + $0x78] sm:$0xff]
    %v80 = vld [vmem:[#allocation7] sm:$0x1]
    %v82 = vperm.slane %v80, 0
    %84 = vmatpush.msra.mxu0 %v79
    %85 = vmatpush.msra.mxu0 %v78
    %86 = vmatpush.msra.mxu0 %v77
    %87 = vmatpush.msra.mxu0 %v76
    %88 = vmatpush.msra.mxu0 %v75
    %89 = vmatpush.msra.mxu0 %v74
    %90 = vmatpush.msra.mxu0 %v73
    %91 = vmatpush.msra.mxu0 %v72
    %92 = vmatpush.msra.mxu0 %v71
    %93 = vmatpush.msra.mxu0 %v70
    %94 = vmatpush.msra.mxu0 %v69
    %95 = vmatpush.msra.mxu0 %v68
    %96 = vmatpush.msra.mxu0 %v67
    %97 = vmatpush.msra.mxu0 %v66
    %98 = vmatpush.msra.mxu0 %v65
    %99 = vmatpush.msra.mxu0 %v64
    %100 = vmatmul.f32.gmra.mxu0 %v62
    %v101 = vpop.f32.mrf.mxu0
    %v102 = vadd.f32 %v82, %v101
    %103 = vmatmul.f32.gmra.mxu0 %v63
    %v104 = vpop.f32.mrf.mxu0
    %v105 = vadd.f32 %v82, %v104
    %106 = vdwg.mxu0
    %v107 = vmax.f32 %v102, 0.0
    %v108 = vmax.f32 %v105, 0.0
    %s109 = scalar_lea.vmem [#allocation5], 128
    %v110 = vld [vmem:[%s109] sm:$0xff]
    %v111 = vld [vmem:[%s109 + $0x8] sm:$0xff]
    %v112 = vld [vmem:[%s109 + $0x10] sm:$0xff]
    %v113 = vld [vmem:[%s109 + $0x18] sm:$0xff]
    %v114 = vld [vmem:[%s109 + $0x20] sm:$0xff]
    %v115 = vld [vmem:[%s109 + $0x28] sm:$0xff]
    %v116 = vld [vmem:[%s109 + $0x30] sm:$0xff]
    %v117 = vld [vmem:[%s109 + $0x38] sm:$0xff]
    %v118 = vld [vmem:[%s109 + $0x40] sm:$0xff]
    %v119 = vld [vmem:[%s109 + $0x48] sm:$0xff]
    %v120 = vld [vmem:[%s109 + $0x50] sm:$0xff]
    %v121 = vld [vmem:[%s109 + $0x58] sm:$0xff]
    %v122 = vld [vmem:[%s109 + $0x60] sm:$0xff]
    %v123 = vld [vmem:[%s109 + $0x68] sm:$0xff]
    %v124 = vld [vmem:[%s109 + $0x70] sm:$0xff]
    %v125 = vld [vmem:[%s109 + $0x78] sm:$0xff]
    %s126 = scalar_lea.vmem [#allocation7], 1
    %v127 = vld [vmem:[%s126] sm:$0x1]
    %v129 = vperm.slane %v127, 0
    %131 = vmatpush.msra.mxu0 %v125
    %132 = vmatpush.msra.mxu0 %v124
    %133 = vmatpush.msra.mxu0 %v123
    %134 = vmatpush.msra.mxu0 %v122
    %135 = vmatpush.msra.mxu0 %v121
    %136 = vmatpush.msra.mxu0 %v120
    %137 = vmatpush.msra.mxu0 %v119
    %138 = vmatpush.msra.mxu0 %v118
    %139 = vmatpush.msra.mxu0 %v117
    %140 = vmatpush.msra.mxu0 %v116
    %141 = vmatpush.msra.mxu0 %v115
    %142 = vmatpush.msra.mxu0 %v114
    %143 = vmatpush.msra.mxu0 %v113
    %144 = vmatpush.msra.mxu0 %v112
    %145 = vmatpush.msra.mxu0 %v111
    %146 = vmatpush.msra.mxu0 %v110
    %147 = vmatmul.f32.gmra.mxu0 %v107
    %v148 = vpop.f32.mrf.mxu0
    %v149 = vadd.f32 %v129, %v148
    %150 = vmatmul.f32.gmra.mxu0 %v108
    %v151 = vpop.f32.mrf.mxu0
    %v152 = vadd.f32 %v129, %v151
    %153 = vdwg.mxu0
    %v154 = vmax.f32 %v149, 0.0
    %v155 = vmax.f32 %v152, 0.0
    %s156 = scalar_lea.vmem [#allocation5], 256
    %v157 = vld [vmem:[%s156] sm:$0xff]
    %v158 = vld [vmem:[%s156 + $0x8] sm:$0xff]
    %v159 = vld [vmem:[%s156 + $0x10] sm:$0xff]
    %v160 = vld [vmem:[%s156 + $0x18] sm:$0xff]
    %v161 = vld [vmem:[%s156 + $0x20] sm:$0xff]
    %v162 = vld [vmem:[%s156 + $0x28] sm:$0xff]
    %v163 = vld [vmem:[%s156 + $0x30] sm:$0xff]
    %v164 = vld [vmem:[%s156 + $0x38] sm:$0xff]
    %v165 = vld [vmem:[%s156 + $0x40] sm:$0xff]
    %v166 = vld [vmem:[%s156 + $0x48] sm:$0xff]
    %v167 = vld [vmem:[%s156 + $0x50] sm:$0xff]
    %v168 = vld [vmem:[%s156 + $0x58] sm:$0xff]
    %v169 = vld [vmem:[%s156 + $0x60] sm:$0xff]
    %v170 = vld [vmem:[%s156 + $0x68] sm:$0xff]
    %v171 = vld [vmem:[%s156 + $0x70] sm:$0xff]
    %v172 = vld [vmem:[%s156 + $0x78] sm:$0xff]
    %s173 = scalar_lea.vmem [#allocation7], 2
    %v174 = vld [vmem:[%s173] sm:$0x1]
    %v176 = vperm.slane %v174, 0
    %178 = vmatpush.msra.mxu0 %v172
    %179 = vmatpush.msra.mxu0 %v171
    %180 = vmatpush.msra.mxu0 %v170
    %181 = vmatpush.msra.mxu0 %v169
    %182 = vmatpush.msra.mxu0 %v168
    %183 = vmatpush.msra.mxu0 %v167
    %184 = vmatpush.msra.mxu0 %v166
    %185 = vmatpush.msra.mxu0 %v165
    %186 = vmatpush.msra.mxu0 %v164
    %187 = vmatpush.msra.mxu0 %v163
    %188 = vmatpush.msra.mxu0 %v162
    %189 = vmatpush.msra.mxu0 %v161
    %190 = vmatpush.msra.mxu0 %v160
    %191 = vmatpush.msra.mxu0 %v159
    %192 = vmatpush.msra.mxu0 %v158
    %193 = vmatpush.msra.mxu0 %v157
    %194 = vmatmul.f32.gmra.mxu0 %v154
    %v195 = vpop.f32.mrf.mxu0
    %v196 = vadd.f32 %v176, %v195
    %197 = vmatmul.f32.gmra.mxu0 %v155
    %v198 = vpop.f32.mrf.mxu0
    %v199 = vadd.f32 %v176, %v198
    %200 = vdwg.mxu0
    %201 = vst [vmem:[#allocation8] sm:$0xff] %v196
    %202 = vst [vmem:[#allocation8 + $0x8] sm:$0xff] %v199
    // Predicated region
    $region26: #{tpu_custom_call.1} parent=1 // pred_check
      _
    $region27: #{tpu_custom_call.1} parent=1 // pred_check_branch
      %204 = sbr.rel (0) target = $region29
    $region28: #{tpu_custom_call.1} parent=1 // pred_region
      %206 = vsyncadd [#allocation4], 0
      %s207 = sshll.u32 [#allocation8], 4
      %s208 = int_to_ptr.vmem [resolvable:$true] %s207
      %s209 = sshll.u32 %s3, 4
      %s210 = int_to_ptr.hbm [resolvable:$true] %s209
      %215 = dma.vmem_to_hbm [thread:$0]  %s208, 256, %s210, [#allocation4], 128, 128, 8
    $region29: #{tpu_custom_call.1} parent=1 // pred_fallthru
      _
    // Predicated region
    $region30: #{tpu_custom_call.1} parent=1 // pred_check
      _
    $region31: #{tpu_custom_call.1} parent=1 // pred_check_branch
      %217 = sbr.rel (0) target = $region33
    $region32: #{tpu_custom_call.1} parent=1 // pred_region
      %219 = dma.done [#allocation4], 256
    $region33: #{tpu_custom_call.1} parent=1 // pred_fallthru
      _
    %220 = vsyncpa [#allocation3], 1
    %221 = vsyncpa [#allocation6], 1
    %222 = vsyncpa [#allocation4], 1

</llo_original>
